<compile_context>
chip_gen: v6e
topology: v6e:2x2x1
jax: 0.10.0
libtpu: 0.0.40
codegen_flags: <defaults>
</compile_context>

<pallas_src>
import jax
import jax.numpy as jnp
from jax.experimental import pallas as pl
from jax.experimental.pallas import tpu as pltpu

LANE = 128


# ----------------------------- Pallas kernel -------------------------------

def _make_fused_kernel(n_layers, stacked, out_pads, compute_dtype, precision):
    """Fused MLP: n_layers of (matmul + bias + relu) on one (TM, K) row tile."""

    def kernel(*refs):
        x_ref = refs[0]                       # (TM, K_PAD)  compute_dtype
        w1_ref = refs[1]                      # (K_PAD, P0)  compute_dtype
        if stacked:
            wstack_ref = refs[2]              # (L-1, P, P)  compute_dtype
            b_ref, o_ref = refs[3], refs[4]   # (L, BMAX) f32, (TM, P_last) f32
        else:
            w_refs = refs[2:1 + n_layers]
            b_ref, o_ref = refs[1 + n_layers], refs[2 + n_layers]

        h = x_ref[...]
        for i in range(n_layers):             # unrolled at trace time
            if i == 0:
                w = w1_ref[...]
            elif stacked:
                w = wstack_ref[i - 1]          # static index -> (P, P)
            else:
                w = w_refs[i - 1][...]
            y = jnp.dot(h.astype(compute_dtype), w,
                        preferred_element_type=jnp.float32,
                        precision=precision)                     # MXU, f32 acc
            # (1, W) bias slice broadcast over sublanes; micro-cost only since
            # the loop has just a few layers.
            y = y + b_ref[i:i + 1, :out_pads[i]]                 # f32 VPU
            h = jnp.maximum(y, 0.0)                              # f32 VPU ReLU
        o_ref[...] = h.astype(o_ref.dtype)

    return kernel


# --------------------------- param preparation ------------------------------

def _round_up(n, m):
    return ((n + m - 1) // m) * m


def init_linear(key, out_features, in_features):
    """Deterministic init mimicking nn.Linear's uniform(-1/sqrt(fan_in), ...)."""
    kw, kb = jax.random.split(key)
    bound = 1.0 / jnp.sqrt(jnp.float32(in_features))
    w = jax.random.uniform(kw, (out_features, in_features), jnp.float32,
                           minval=-bound, maxval=bound)
    b = jax.random.uniform(kb, (out_features,), jnp.float32,
                           minval=-bound, maxval=bound)
    return w, b


def init_fcaux_params(key, h_shapes):
    """PyTorch-layout params: w is (out_features, in_features)."""
    length = len(h_shapes)
    keys = jax.random.split(key, (length - 1) + 4)
    params = {"hidden": []}
    for i in range(length - 1):
        params["hidden"].append(init_linear(keys[i], h_shapes[i + 1], h_shapes[i]))
    params["fc1"] = init_linear(keys[length - 1], h_shapes[0], 392)
    params["fc3"] = init_linear(keys[length + 0], 2, h_shapes[length - 1])
    params["fc4"] = init_linear(keys[length + 1], 10, h_shapes[length - 1])
    params["fc5"] = init_linear(keys[length + 2], 10, h_shapes[length - 1])
    return params


def prepare_fcaux_params(params, weight_dtype=jnp.bfloat16):
    """One-time transform (hoisted out of the forward):
       - transpose every weight to (In, Out),
       - concat the fc3/fc4/fc5 heads into one (h_last, 22) layer,
       - pad fc1's K dim 392 -> 512,
       - pad every layer's out dim to its own 128-lane multiple (exact),
       - stack the post-fc1 layers into one (L-1, P, P) tensor when uniform,
       - stack all biases (f32) into one (L, BMAX) buffer,
       - store weights in `weight_dtype` (bf16 by default)."""
    layers = []
    w, b = params["fc1"]
    layers.append((w.T, b))                                   # (392, h0)
    for (w, b) in params["hidden"]:
        layers.append((w.T, b))
    w3, b3 = params["fc3"]
    w4, b4 = params["fc4"]
    w5, b5 = params["fc5"]
    layers.append((jnp.concatenate([w3.T, w4.T, w5.T], axis=1),
                   jnp.concatenate([b3, b4, b5], axis=0)))    # (h_last, 22)

    n_layers = len(layers)
    k_real = layers[0][0].shape[0]                            # 392
    k_pad = _round_up(k_real, LANE)                           # 512
    out_pads = tuple(_round_up(wt.shape[1], LANE) for wt, _ in layers)
    bmax = max(out_pads)

    w1, _ = layers[0]
    w1_p = jnp.pad(w1, ((0, k_pad - k_real),
                        (0, out_pads[0] - w1.shape[1]))).astype(weight_dtype)

    rest = []
    for i in range(1, n_layers):
        wt, _ = layers[i]
        in_pad = out_pads[i - 1]
        wt_p = jnp.pad(wt, ((0, in_pad - wt.shape[0]),
                            (0, out_pads[i] - wt.shape[1])))
        rest.append(wt_p.astype(weight_dtype))

    stacked = all(p == out_pads[0] for p in out_pads)
    w_rest = jnp.stack(rest, axis=0) if stacked else tuple(rest)

    biases = [jnp.pad(b, (0, bmax - b.shape[0])) for _, b in layers]
    bias_stack = jnp.stack(biases, axis=0).astype(jnp.float32)  # (L, BMAX)

    head_sizes = (params["fc3"][0].shape[0],
                  params["fc4"][0].shape[0],
                  params["fc5"][0].shape[0])
    return dict(w1=w1_p, w_rest=w_rest, bias=bias_stack,
                out_pads=out_pads, stacked=stacked, k_pad=k_pad,
                in_features=k_real, head_sizes=head_sizes,
                weight_dtype=weight_dtype)


# ------------------------------ fused forward -------------------------------

def make_fcaux_forward(prepared, tm=128):
    out_pads = prepared["out_pads"]
    stacked = prepared["stacked"]
    n_layers = len(out_pads)
    k_pad = prepared["k_pad"]
    k_real = prepared["in_features"]
    bmax = prepared["bias"].shape[1]
    d3, d4, d5 = prepared["head_sizes"]
    wdtype = prepared["weight_dtype"]
    # f32 weights + HIGHEST precision => exact nn.Linear parity path (opt-in).
    precision = (jax.lax.Precision.HIGHEST
                 if jnp.dtype(wdtype) == jnp.dtype(jnp.float32) else None)
    kernel = _make_fused_kernel(n_layers, stacked, out_pads, wdtype, precision)

    # Static resident-operand byte count for the cost estimate.
    w_bytes = prepared["w1"].size * prepared["w1"].dtype.itemsize
    if stacked:
        w_bytes += prepared["w_rest"].size * prepared["w_rest"].dtype.itemsize
    else:
        w_bytes += sum(w.size * w.dtype.itemsize for w in prepared["w_rest"])
    w_bytes += prepared["bias"].size * prepared["bias"].dtype.itemsize

    dims_in = (k_pad,) + out_pads[:-1]
    flops_per_row = 2 * sum(di * do for di, do in zip(dims_in, out_pads))
    x_itemsize = jnp.dtype(wdtype).itemsize

    @jax.jit
    def forward_fused(w1, w_rest, bias, x):
        batch = x.shape[0]
        bp = _round_up(batch, tm)
        grid_n = bp // tm
        # Pad rows to a tile multiple and K 392->512; cast to the MXU operand
        # dtype once, outside the kernel (halves the x DMA for bf16).
        x_p = jnp.pad(x, ((0, bp - batch), (0, k_pad - k_real))).astype(wdtype)

        in_specs = [
            pl.BlockSpec((tm, k_pad), lambda n: (n, 0)),             # x: per-step
            pl.BlockSpec((k_pad, out_pads[0]), lambda n: (0, 0)),    # fc1 w: resident
        ]
        if stacked:
            in_specs.append(pl.BlockSpec(w_rest.shape, lambda n: (0, 0, 0)))
            w_args = (w_rest,)
        else:
            for w in w_rest:
                in_specs.append(pl.BlockSpec(w.shape, lambda n: (0, 0)))
            w_args = tuple(w_rest)
        in_specs.append(pl.BlockSpec((n_layers, bmax), lambda n: (0, 0)))  # biases
        out_spec = pl.BlockSpec((tm, out_pads[-1]), lambda n: (n, 0))

        cost = pl.CostEstimate(
            flops=int(flops_per_row * bp),
            transcendentals=0,
            bytes_accessed=int(bp * k_pad * x_itemsize + w_bytes
                               + bp * out_pads[-1] * 4))

        fused = pl.pallas_call(
            kernel,
            out_shape=jax.ShapeDtypeStruct((bp, out_pads[-1]), jnp.float32),
            grid=(grid_n,),
            in_specs=in_specs,
            out_specs=out_spec,
            compiler_params=pltpu.CompilerParams(
                dimension_semantics=("parallel",)),   # v7x: split grid over 2 TCs
            cost_estimate=cost,
        )(x_p, w1, *w_args, bias)
        return fused[:batch]                          # lane-dense (B, 128)

    @jax.jit
    def split_heads(fused):
        return (fused[:, :d3],
                fused[:, d3:d3 + d4],
                fused[:, d3 + d4:d3 + d4 + d5])

    @jax.jit
    def forward(w1, w_rest, bias, x):
        return split_heads(forward_fused(w1, w_rest, bias, x))

    return forward, forward_fused, split_heads


# ---------------------------- pure-JAX references ---------------------------

def fcaux_reference(params, x):
    """f32 PyTorch-equivalent reference."""
    def lin(p, v):
        w, b = p
        return v @ w.T + b

    h = jax.nn.relu(lin(params["fc1"], x))
    for p in params["hidden"]:
        h = jax.nn.relu(lin(p, h))
    y = jax.nn.relu(lin(params["fc4"], h))
    z = jax.nn.relu(lin(params["fc5"], h))
    xo = jax.nn.relu(lin(params["fc3"], h))
    return xo, y, z


def fcaux_reference_matched(prepared, x):
    """Reference that mirrors the kernel math exactly (bf16 operands, f32 acc)."""
    wdtype = prepared["weight_dtype"]
    precision = (jax.lax.Precision.HIGHEST
                 if jnp.dtype(wdtype) == jnp.dtype(jnp.float32) else None)
    k_pad, k_real = prepared["k_pad"], prepared["in_features"]
    out_pads, bias = prepared["out_pads"], prepared["bias"]
    rest = prepared["w_rest"]
    if prepared["stacked"]:
        rest = [rest[i] for i in range(rest.shape[0])]
    ws = [prepared["w1"]] + list(rest)

    h = jnp.pad(x, ((0, 0), (0, k_pad - k_real)))
    for i, w in enumerate(ws):
        y = jnp.dot(h.astype(wdtype), w, preferred_element_type=jnp.float32,
                    precision=precision)
        h = jnp.maximum(y + bias[i, :out_pads[i]], 0.0)
    d3, d4, d5 = prepared["head_sizes"]
    return h[:, :d3], h[:, d3:d3 + d4], h[:, d3 + d4:d3 + d4 + d5]


# --------------------------------- main -------------------------------------

if __name__ == "__main__":
    key = jax.random.PRNGKey(0)
    k_param, k_input = jax.random.split(key)

    h_shapes = [64, 32]                 # hidden stack: 392 -> 64 -> 32
    batch = 256                         # >=128 rows per grid step; grid=(2,)
    params = init_fcaux_params(k_param, h_shapes)
    x = jax.random.normal(k_input, (batch, 392), jnp.float32)

    prepared = prepare_fcaux_params(params, weight_dtype=jnp.bfloat16)
    forward, forward_fused, split_heads = make_fcaux_forward(prepared, tm=128)

    out_x, out_y, out_z = forward(prepared["w1"], prepared["w_rest"],
                                  prepared["bias"], x)
    jax.block_until_ready((out_x, out_y, out_z))

    assert out_x.shape == (batch, 2)
    assert out_y.shape == (batch, 10)
    assert out_z.shape == (batch, 10)

    # Structural check: pure-JAX reference using the identical bf16 weights /
    # math order -> must match tightly.
    m_x, m_y, m_z = fcaux_reference_matched(prepared, x)
    assert bool(jnp.allclose(out_x, m_x, rtol=5e-3, atol=5e-3))
    assert bool(jnp.allclose(out_y, m_y, rtol=5e-3, atol=5e-3))
    assert bool(jnp.allclose(out_z, m_z, rtol=5e-3, atol=5e-3))

    # Approximation check vs. the f32 PyTorch-equivalent reference (bf16 weight
    # storage introduces ~0.2% relative error; use weight_dtype=f32 for parity).
    r_x, r_y, r_z = fcaux_reference(params, x)
    assert bool(jnp.allclose(out_x, r_x, rtol=5e-2, atol=5e-2))
    assert bool(jnp.allclose(out_y, r_y, rtol=5e-2, atol=5e-2))
    assert bool(jnp.allclose(out_z, r_z, rtol=5e-2, atol=5e-2))
    assert bool(jnp.all(out_x >= 0)) and bool(jnp.all(out_y >= 0)) and bool(jnp.all(out_z >= 0))

    print("KERNEL_OK")
</pallas_src>

<mosaic_0001>
module attributes {stable_mosaic.version = 11 : i64} {
  func.func @kernel(%arg0: i32, %arg1: memref<128x512xbf16, #tpu.memory_space<vmem>>, %arg2: memref<512x128xbf16, #tpu.memory_space<vmem>>, %arg3: memref<2x128x128xbf16, #tpu.memory_space<vmem>>, %arg4: memref<3x128xf32, #tpu.memory_space<vmem>>, %arg5: memref<128x128xf32, #tpu.memory_space<vmem>>) attributes {dimension_semantics = [#tpu.dimension_semantics<parallel>], iteration_bounds = array<i64: 2>, scalar_prefetch = 0 : i64, scratch_operands = 0 : i64, tpu.core_type = #tpu.core_type<tc>, window_params = [{transform_indices = @transform_0, window_bounds = array<i64: 128, 512>}, {pipeline_mode = #tpu.pipeline_mode<synchronous>, transform_indices = @transform_1, window_bounds = array<i64: 512, 128>}, {pipeline_mode = #tpu.pipeline_mode<synchronous>, transform_indices = @transform_2, window_bounds = array<i64: 2, 128, 128>}, {pipeline_mode = #tpu.pipeline_mode<synchronous>, transform_indices = @transform_3, window_bounds = array<i64: 3, 128>}, {transform_indices = @transform_4, window_bounds = array<i64: 128, 128>}]} {
    %c0 = arith.constant 0 : index
    %c0_0 = arith.constant 0 : index
    %0 = vector.load %arg1[%c0, %c0_0] : memref<128x512xbf16, #tpu.memory_space<vmem>>, vector<128x512xbf16>
    %c0_1 = arith.constant 0 : index
    %c0_2 = arith.constant 0 : index
    %1 = vector.load %arg2[%c0_1, %c0_2] : memref<512x128xbf16, #tpu.memory_space<vmem>>, vector<512x128xbf16>
    %cst = arith.constant dense<0.000000e+00> : vector<128x128xf32>
    %2 = tpu.matmul %0, %1, %cst {dimension_numbers = #tpu.dot_dimension_numbers<[1], [0], [0], [1], [0, 0, 1, 1], [], []>} : vector<128x512xbf16>, vector<512x128xbf16>, vector<128x128xf32> -> vector<128x128xf32>
    %c0_3 = arith.constant 0 : index
    %c0_4 = arith.constant 0 : index
    %3 = vector.load %arg4[%c0_3, %c0_4] : memref<3x128xf32, #tpu.memory_space<vmem>>, vector<1x128xf32>
    %4 = vector.broadcast %3 : vector<1x128xf32> to vector<128x128xf32>
    %5 = arith.addf %2, %4 : vector<128x128xf32>
    %cst_5 = arith.constant 0.000000e+00 : f32
    %6 = vector.broadcast %cst_5 : f32 to vector<128x128xf32>
    %7 = arith.maximumf %5, %6 : vector<128x128xf32>
    %c0_6 = arith.constant 0 : index
    %c0_7 = arith.constant 0 : index
    %c0_8 = arith.constant 0 : index
    %8 = vector.load %arg3[%c0_6, %c0_7, %c0_8] : memref<2x128x128xbf16, #tpu.memory_space<vmem>>, vector<1x128x128xbf16>
    %9 = vector.shape_cast %8 : vector<1x128x128xbf16> to vector<128x128xbf16>
    %10 = arith.truncf %7 : vector<128x128xf32> to vector<128x128xbf16>
    %cst_9 = arith.constant dense<0.000000e+00> : vector<128x128xf32>
    %11 = tpu.matmul %10, %9, %cst_9 {dimension_numbers = #tpu.dot_dimension_numbers<[1], [0], [0], [1], [0, 0, 1, 1], [], []>} : vector<128x128xbf16>, vector<128x128xbf16>, vector<128x128xf32> -> vector<128x128xf32>
    %c1 = arith.constant 1 : index
    %c0_10 = arith.constant 0 : index
    %12 = vector.load %arg4[%c1, %c0_10] : memref<3x128xf32, #tpu.memory_space<vmem>>, vector<1x128xf32>
    %13 = vector.broadcast %12 : vector<1x128xf32> to vector<128x128xf32>
    %14 = arith.addf %11, %13 : vector<128x128xf32>
    %cst_11 = arith.constant 0.000000e+00 : f32
    %15 = vector.broadcast %cst_11 : f32 to vector<128x128xf32>
    %16 = arith.maximumf %14, %15 : vector<128x128xf32>
    %c1_12 = arith.constant 1 : index
    %c0_13 = arith.constant 0 : index
    %c0_14 = arith.constant 0 : index
    %17 = vector.load %arg3[%c1_12, %c0_13, %c0_14] : memref<2x128x128xbf16, #tpu.memory_space<vmem>>, vector<1x128x128xbf16>
    %18 = vector.shape_cast %17 : vector<1x128x128xbf16> to vector<128x128xbf16>
    %19 = arith.truncf %16 : vector<128x128xf32> to vector<128x128xbf16>
    %cst_15 = arith.constant dense<0.000000e+00> : vector<128x128xf32>
    %20 = tpu.matmul %19, %18, %cst_15 {dimension_numbers = #tpu.dot_dimension_numbers<[1], [0], [0], [1], [0, 0, 1, 1], [], []>} : vector<128x128xbf16>, vector<128x128xbf16>, vector<128x128xf32> -> vector<128x128xf32>
    %c2 = arith.constant 2 : index
    %c0_16 = arith.constant 0 : index
    %21 = vector.load %arg4[%c2, %c0_16] : memref<3x128xf32, #tpu.memory_space<vmem>>, vector<1x128xf32>
    %22 = vector.broadcast %21 : vector<1x128xf32> to vector<128x128xf32>
    %23 = arith.addf %20, %22 : vector<128x128xf32>
    %cst_17 = arith.constant 0.000000e+00 : f32
    %24 = vector.broadcast %cst_17 : f32 to vector<128x128xf32>
    %25 = arith.maximumf %23, %24 : vector<128x128xf32>
    %c0_18 = arith.constant 0 : index
    %c0_19 = arith.constant 0 : index
    %26 = vector.load %arg5[%c0_18, %c0_19] : memref<128x128xf32, #tpu.memory_space<vmem>>, vector<128x128xf32>
    tpu.vector_store %arg5[%c0_18, %c0_19], %25 {strides = array<i32>} : memref<128x128xf32, #tpu.memory_space<vmem>>, vector<128x128xf32>,
    return
  }
  func.func @transform_0(%arg0: i32) -> (i32, i32) {
    %c0_i32 = arith.constant 0 : i32
    %c0_i32_0 = arith.constant 0 : i32
    return %arg0, %c0_i32 : i32, i32
  }
  func.func @transform_1(%arg0: i32) -> (i32, i32) {
    %c0_i32 = arith.constant 0 : i32
    %c0_i32_0 = arith.constant 0 : i32
    %c0_i32_1 = arith.constant 0 : i32
    return %c0_i32, %c0_i32_0 : i32, i32
  }
  func.func @transform_2(%arg0: i32) -> (i32, i32, i32) {
    %c0_i32 = arith.constant 0 : i32
    %c0_i32_0 = arith.constant 0 : i32
    %c0_i32_1 = arith.constant 0 : i32
    %c0_i32_2 = arith.constant 0 : i32
    return %c0_i32, %c0_i32_0, %c0_i32_1 : i32, i32, i32
  }
  func.func @transform_3(%arg0: i32) -> (i32, i32) {
    %c0_i32 = arith.constant 0 : i32
    %c0_i32_0 = arith.constant 0 : i32
    %c0_i32_1 = arith.constant 0 : i32
    return %c0_i32, %c0_i32_0 : i32, i32
  }
  func.func @transform_4(%arg0: i32) -> (i32, i32) {
    %c0_i32 = arith.constant 0 : i32
    %c0_i32_0 = arith.constant 0 : i32
    return %arg0, %c0_i32 : i32, i32
  }
}

</mosaic_0001>

<llo_original>
// kernel: forward_fused.1
$region0: #{forward_fused.1}
  #allocation0 [shape = 'u32[]', space=smem, size = 0x4, offset = 0x4, fixed_abs, tag = 'smem constant byte address 0x4 - core index']
  #allocation1 [shape = 'u32[144,128]{1,0:T(1,128)}', space=vmem, size = 0x12000, scoped, tag = 'internal scratch']
  %s0 = inlined_call_operand.vmem [shape: bf16[256,512], index: 0, kind: input, shape index: {}]
  %s1 = inlined_call_operand.vmem [shape: bf16[512,128], index: 1, kind: input, shape index: {}]
  %s2 = inlined_call_operand.vmem [shape: bf16[2,128,128], index: 2, kind: input, shape index: {}]
  %s3 = inlined_call_operand.vmem [shape: f32[3,128], index: 3, kind: input, shape index: {}]
  %s4 = inlined_call_operand.hbm [shape: f32[256,128], index: 4, kind: output, shape index: {}]
  %s5 = sld [smem:[#allocation0]]
  $region49: #{forward_fused.1} parent=0
    _
  %s7 = ssub.s32 1, %s5
  %s8 = scalar_select 0, %s7, %s5
  $region1: #{forward_fused.1} parent=0
    #allocation2 [shape = 'u8[131072]{0}', space=vmem, size = 0x20000, scoped, tag = 'output window, operand 0']
    #allocation3 [shape = 's32[2]{0}', space=sflag, size = 0x8, scoped, tag = 'scoped memory for forward_fused.1']
    %9 = vsyncpa [#allocation3], 0
    %s10 = scalar_lea.sflag [#allocation3], 1
    %11 = vsyncpa %s10, 0
    loop: start=0, step=1, limit=4
    $region2: #{forward_fused.1} parent=1 // loop_pre_header
      _
    $region3: #{forward_fused.1} parent=1 // loop_header
      %s13 = sphi 0, %s17
      %p14 = scmp.ge.s32.totalorder %s13, 4
      %s23 = sphi 0, %s25
      %s26 = sphi 0, %s23
      %s27 = sphi 0, %s26
      %s43 = sphi 0, %s27
      %s47 = sphi 0, %s47
      %s49 = sphi 0, %s47
      %s50 = sphi 0, %s49
      %s64 = sphi 0, %s50
      %s68 = sphi 0, %s68
      %s70 = sphi 0, %s68
      %s71 = sphi 0, %s70
      %s85 = sphi 0, %s71
      %s89 = sphi 0, %s89
      %s91 = sphi 0, %s89
      %s92 = sphi 0, %s91
      %s106 = sphi 0, %s92
      %s112 = sphi 0, %s114
      %s115 = sphi 0, %s112
      %s116 = sphi 0, %s115
      %s132 = sphi 0, %s116
    $region4: #{forward_fused.1} parent=1 // loop_header_branch
      %16 = sbr.rel (%p14) target = $region8
    $region5: #{forward_fused.1} parent=1 // loop_body
      %s18 = ssub.s32 %s13, 1
      %s19 = ssub.s32 %s13, 2
      %s20 = sadd.s32 %s13, 1
      %s21 = ssub.s32 %s13, %s20
      %p22 = scmp.eq.s32.totalorder %s21, 0
      %s24 = sadd.s32 %s23, 1
      %s25 = scalar_select %p22, %s23, %s24
      %p28 = pneg %p22
      %p29 = scmp.eq.s32.totalorder %s13, 1
      %p30 = por %p28, %p29
      %p31 = scmp.ne.s32.totalorder %s23, %s26
      %p32 = scmp.eq.s32.totalorder %s13, 0
      %p33 = por %p31, %p32
      %p34 = scmp.ne.s32.totalorder %s23, %s26
      %p35 = scmp.eq.s32.totalorder %s18, 1
      %p36 = por %p34, %p35
      %p37 = scmp.ne.s32.totalorder %s26, %s27
      %p38 = scmp.eq.s32.totalorder %s18, 0
      %p39 = por %p37, %p38
      %p40 = scmp.ne.s32.totalorder %s26, %s27
      %p41 = scmp.eq.s32.totalorder %s19, 1
      %p42 = por %p40, %p41
      %p44 = scmp.ne.s32.totalorder %s27, %s43
      %p45 = scmp.eq.s32.totalorder %s19, 0
      %p46 = por %p44, %p45
      %s48 = sadd.s32 %s47, 1
      %p51 = scmp.eq.s32.totalorder %s13, 1
      %p52 = scmp.ne.s32.totalorder %s47, %s49
      %p53 = scmp.eq.s32.totalorder %s13, 0
      %p54 = por %p52, %p53
      %p55 = scmp.ne.s32.totalorder %s47, %s49
      %p56 = scmp.eq.s32.totalorder %s18, 1
      %p57 = por %p55, %p56
      %p58 = scmp.ne.s32.totalorder %s49, %s50
      %p59 = scmp.eq.s32.totalorder %s18, 0
      %p60 = por %p58, %p59
      %p61 = scmp.ne.s32.totalorder %s49, %s50
      %p62 = scmp.eq.s32.totalorder %s19, 1
      %p63 = por %p61, %p62
      %p65 = scmp.ne.s32.totalorder %s50, %s64
      %p66 = scmp.eq.s32.totalorder %s19, 0
      %p67 = por %p65, %p66
      %s69 = sadd.s32 %s68, 1
      %p72 = scmp.eq.s32.totalorder %s13, 1
      %p73 = scmp.ne.s32.totalorder %s68, %s70
      %p74 = scmp.eq.s32.totalorder %s13, 0
      %p75 = por %p73, %p74
      %p76 = scmp.ne.s32.totalorder %s68, %s70
      %p77 = scmp.eq.s32.totalorder %s18, 1
      %p78 = por %p76, %p77
      %p79 = scmp.ne.s32.totalorder %s70, %s71
      %p80 = scmp.eq.s32.totalorder %s18, 0
      %p81 = por %p79, %p80
      %p82 = scmp.ne.s32.totalorder %s70, %s71
      %p83 = scmp.eq.s32.totalorder %s19, 1
      %p84 = por %p82, %p83
      %p86 = scmp.ne.s32.totalorder %s71, %s85
      %p87 = scmp.eq.s32.totalorder %s19, 0
      %p88 = por %p86, %p87
      %s90 = sadd.s32 %s89, 1
      %p93 = scmp.eq.s32.totalorder %s13, 1
      %p94 = scmp.ne.s32.totalorder %s89, %s91
      %p95 = scmp.eq.s32.totalorder %s13, 0
      %p96 = por %p94, %p95
      %p97 = scmp.ne.s32.totalorder %s89, %s91
      %p98 = scmp.eq.s32.totalorder %s18, 1
      %p99 = por %p97, %p98
      %p100 = scmp.ne.s32.totalorder %s91, %s92
      %p101 = scmp.eq.s32.totalorder %s18, 0
      %p102 = por %p100, %p101
      %p103 = scmp.ne.s32.totalorder %s91, %s92
      %p104 = scmp.eq.s32.totalorder %s19, 1
      %p105 = por %p103, %p104
      %p107 = scmp.ne.s32.totalorder %s92, %s106
      %p108 = scmp.eq.s32.totalorder %s19, 0
      %p109 = por %p107, %p108
      %s110 = ssub.s32 %s13, %s20
      %p111 = scmp.eq.s32.totalorder %s110, 0
      %s113 = sadd.s32 %s112, 1
      %s114 = scalar_select %p111, %s112, %s113
      %p117 = pneg %p111
      %p118 = scmp.eq.s32.totalorder %s13, 1
      %p119 = por %p117, %p118
      %p120 = scmp.ne.s32.totalorder %s112, %s115
      %p121 = scmp.eq.s32.totalorder %s13, 0
      %p122 = por %p120, %p121
      %p123 = scmp.ne.s32.totalorder %s112, %s115
      %p124 = scmp.eq.s32.totalorder %s18, 1
      %p125 = por %p123, %p124
      %p126 = scmp.ne.s32.totalorder %s115, %s116
      %p127 = scmp.eq.s32.totalorder %s18, 0
      %p128 = por %p126, %p127
      %p129 = scmp.ne.s32.totalorder %s115, %s116
      %p130 = scmp.eq.s32.totalorder %s19, 1
      %p131 = por %p129, %p130
      %p133 = scmp.ne.s32.totalorder %s116, %s132
      %p134 = scmp.eq.s32.totalorder %s19, 0
      %p135 = por %p133, %p134
      %p136 = scmp.le.s32.totalorder 1, %s13
      %p137 = scmp.lt.s32.totalorder %s13, 3
      %p138 = pnand %p136, %p137
      %p139 = pneg %p138
      // Predicated region
      $region9: #{forward_fused.1} parent=5 // pred_check
        _
      $region10: #{forward_fused.1} parent=5 // pred_check_branch
        %141 = sbr.rel (%p138) target = $region12
      $region11: #{forward_fused.1} parent=5 // pred_region
        %s142 = ssub.s32 %s13, 1
        // Predicated region
        $region13: #{forward_fused.1} parent=11 // pred_check
          %p143 = pneg %p60
        $region14: #{forward_fused.1} parent=11 // pred_check_branch
          %145 = sbr.rel (%p143) target = $region16
        $region15: #{forward_fused.1} parent=11 // pred_region
          _
        $region16: #{forward_fused.1} parent=11 // pred_fallthru
          _
        // Predicated region
        $region17: #{forward_fused.1} parent=11 // pred_check
          %p146 = pneg %p81
        $region18: #{forward_fused.1} parent=11 // pred_check_branch
          %148 = sbr.rel (%p146) target = $region20
        $region19: #{forward_fused.1} parent=11 // pred_region
          _
        $region20: #{forward_fused.1} parent=11 // pred_fallthru
          _
        // Predicated region
        $region21: #{forward_fused.1} parent=11 // pred_check
          %p149 = pneg %p102
        $region22: #{forward_fused.1} parent=11 // pred_check_branch
          %151 = sbr.rel (%p149) target = $region24
        $region23: #{forward_fused.1} parent=11 // pred_region
          _
        $region24: #{forward_fused.1} parent=11 // pred_fallthru
          _
      $region12: #{forward_fused.1} parent=5 // pred_fallthru
        _
      %p152 = scmp.lt.s32.totalorder %s13, 2
      // Predicated region
      $region25: #{forward_fused.1} parent=5 // pred_check
        %p153 = pneg %p152
      $region26: #{forward_fused.1} parent=5 // pred_check_branch
        %155 = sbr.rel (%p153) target = $region28
      $region27: #{forward_fused.1} parent=5 // pred_region
        // Predicated region
        $region29: #{forward_fused.1} parent=27 // pred_check
          %p156 = pneg %p33
        $region30: #{forward_fused.1} parent=27 // pred_check_branch
          %158 = sbr.rel (%p156) target = $region32
        $region31: #{forward_fused.1} parent=27 // pred_region
          %s159 = smul.u32 16, %s13
          %p160 = scmp.lt.s32.totalorder %s159, 31
          %s161 = scalar_select %p160, %s159, 31
          %s162 = smul.addr %s161, 4
          %s163 = smul.addr %s162, 4
          %s164 = scalar_lea.vmem %s0, %s163
          %s165 = smul.u32 16, %s13
        $region32: #{forward_fused.1} parent=27 // pred_fallthru
          _
      $region28: #{forward_fused.1} parent=5 // pred_fallthru
        _
      %p166 = scmp.le.s32.totalorder 1, %s13
      %p167 = scmp.lt.s32.totalorder %s13, 3
      %p168 = pnand %p166, %p167
      %p169 = pneg %p168
      // Predicated region
      $region33: #{forward_fused.1} parent=5 // pred_check
        _
      $region34: #{forward_fused.1} parent=5 // pred_check_branch
        %171 = sbr.rel (%p168) target = $region36
      $region35: #{forward_fused.1} parent=5 // pred_region
        %s172 = ssub.s32 %s13, 1
        %s173 = smul.u32 16, %s18
        %p174 = scmp.lt.s32.totalorder %s173, 31
        %s175 = scalar_select %p174, %s173, 31
        %s176 = smul.addr %s175, 4
        %s177 = smul.addr %s176, 4
        %s178 = scalar_lea.vmem %s0, %s177
        %p179 = pneg %p39
        %p180 = pneg %p36
        %p181 = pneg %p60
        %p182 = pneg %p57
        %p183 = pneg %p81
        %p184 = pneg %p78
        %p185 = pneg %p102
        %p186 = pneg %p99
        %p187 = pneg %p128
        %p188 = pneg %p125
        %s189 = sand.u32 %s115, 1
        %s190 = scalar_lea.sflag [#allocation3], %s189
        %s191 = sand.u32 %s115, 1
        %s192 = smul.addr %s191, 128
        %s193 = scalar_lea.vmem [#allocation2], %s192
        %s194 = smul.u32 16, %s18
        %p195 = scmp.lt.s32.totalorder %s194, 31
        %s196 = scalar_select %p195, %s194, 31
        %s197 = smul.addr %s196, 4
        %s198 = smul.addr %s197, 4
        %s199 = scalar_lea.vmem %s0, %s198
        %s200 = smul.u32 16, %s18
        %s201 = smul.u32 16, %s18
        %v203 = vld [vmem:[%s199] sm:$0xff]
        %v204 = vld [vmem:[%s199 + $0x8] sm:$0xff]
        %v205 = vld [vmem:[%s199 + $0x10] sm:$0xff]
        %v206 = vld [vmem:[%s199 + $0x18] sm:$0xff]
        %v207 = vld [vmem:[%s199 + $0x20] sm:$0xff]
        %v208 = vld [vmem:[%s199 + $0x28] sm:$0xff]
        %v209 = vld [vmem:[%s199 + $0x30] sm:$0xff]
        %v210 = vld [vmem:[%s199 + $0x38] sm:$0xff]
        %v211 = vld [vmem:[%s199 + $0x40] sm:$0xff]
        %v212 = vld [vmem:[%s199 + $0x48] sm:$0xff]
        %v213 = vld [vmem:[%s199 + $0x50] sm:$0xff]
        %v214 = vld [vmem:[%s199 + $0x58] sm:$0xff]
        %v215 = vld [vmem:[%s199 + $0x60] sm:$0xff]
        %v216 = vld [vmem:[%s199 + $0x68] sm:$0xff]
        %v217 = vld [vmem:[%s199 + $0x70] sm:$0xff]
        %v218 = vld [vmem:[%s199 + $0x78] sm:$0xff]
        %v219 = vld [vmem:[%s199 + $0x80] sm:$0xff]
        %v220 = vld [vmem:[%s199 + $0x88] sm:$0xff]
        %v221 = vld [vmem:[%s199 + $0x90] sm:$0xff]
        %v222 = vld [vmem:[%s199 + $0x98] sm:$0xff]
        %v223 = vld [vmem:[%s199 + $0xa0] sm:$0xff]
        %v224 = vld [vmem:[%s199 + $0xa8] sm:$0xff]
        %v225 = vld [vmem:[%s199 + $0xb0] sm:$0xff]
        %v226 = vld [vmem:[%s199 + $0xb8] sm:$0xff]
        %v227 = vld [vmem:[%s199 + $0xc0] sm:$0xff]
        %v228 = vld [vmem:[%s199 + $0xc8] sm:$0xff]
        %v229 = vld [vmem:[%s199 + $0xd0] sm:$0xff]
        %v230 = vld [vmem:[%s199 + $0xd8] sm:$0xff]
        %v231 = vld [vmem:[%s199 + $0xe0] sm:$0xff]
        %v232 = vld [vmem:[%s199 + $0xe8] sm:$0xff]
        %v233 = vld [vmem:[%s199 + $0xf0] sm:$0xff]
        %v234 = vld [vmem:[%s199 + $0xf8] sm:$0xff]
        %v235 = vld [vmem:[%s1] sm:$0xf]
        %v236 = vld [vmem:[%s1 + $0x4] sm:$0xf]
        %v237 = vld [vmem:[%s1 + $0x8] sm:$0xf]
        %v238 = vld [vmem:[%s1 + $0xc] sm:$0xf]
        %v239 = vld [vmem:[%s1 + $0x10] sm:$0xf]
        %v240 = vld [vmem:[%s1 + $0x14] sm:$0xf]
        %v241 = vld [vmem:[%s1 + $0x18] sm:$0xf]
        %v242 = vld [vmem:[%s1 + $0x1c] sm:$0xf]
        %v243 = vld [vmem:[%s1 + $0x20] sm:$0xf]
        %v244 = vld [vmem:[%s1 + $0x24] sm:$0xf]
        %v245 = vld [vmem:[%s1 + $0x28] sm:$0xf]
        %v246 = vld [vmem:[%s1 + $0x2c] sm:$0xf]
        %v247 = vld [vmem:[%s1 + $0x30] sm:$0xf]
        %v248 = vld [vmem:[%s1 + $0x34] sm:$0xf]
        %v249 = vld [vmem:[%s1 + $0x38] sm:$0xf]
        %v250 = vld [vmem:[%s1 + $0x3c] sm:$0xf]
        %v251 = vld [vmem:[%s1 + $0x40] sm:$0xf]
        %v252 = vld [vmem:[%s1 + $0x44] sm:$0xf]
        %v253 = vld [vmem:[%s1 + $0x48] sm:$0xf]
        %v254 = vld [vmem:[%s1 + $0x4c] sm:$0xf]
        %v255 = vld [vmem:[%s1 + $0x50] sm:$0xf]
        %v256 = vld [vmem:[%s1 + $0x54] sm:$0xf]
        %v257 = vld [vmem:[%s1 + $0x58] sm:$0xf]
        %v258 = vld [vmem:[%s1 + $0x5c] sm:$0xf]
        %v259 = vld [vmem:[%s1 + $0x60] sm:$0xf]
        %v260 = vld [vmem:[%s1 + $0x64] sm:$0xf]
        %v261 = vld [vmem:[%s1 + $0x68] sm:$0xf]
        %v262 = vld [vmem:[%s1 + $0x6c] sm:$0xf]
        %v263 = vld [vmem:[%s1 + $0x70] sm:$0xf]
        %v264 = vld [vmem:[%s1 + $0x74] sm:$0xf]
        %v265 = vld [vmem:[%s1 + $0x78] sm:$0xf]
        %v266 = vld [vmem:[%s1 + $0x7c] sm:$0xf]
        %v267 = vld [vmem:[%s1 + $0x80] sm:$0xf]
        %v268 = vld [vmem:[%s1 + $0x84] sm:$0xf]
        %v269 = vld [vmem:[%s1 + $0x88] sm:$0xf]
        %v270 = vld [vmem:[%s1 + $0x8c] sm:$0xf]
        %v271 = vld [vmem:[%s1 + $0x90] sm:$0xf]
        %v272 = vld [vmem:[%s1 + $0x94] sm:$0xf]
        %v273 = vld [vmem:[%s1 + $0x98] sm:$0xf]
        %v274 = vld [vmem:[%s1 + $0x9c] sm:$0xf]
        %v275 = vld [vmem:[%s1 + $0xa0] sm:$0xf]
        %v276 = vld [vmem:[%s1 + $0xa4] sm:$0xf]
        %v277 = vld [vmem:[%s1 + $0xa8] sm:$0xf]
        %v278 = vld [vmem:[%s1 + $0xac] sm:$0xf]
        %v279 = vld [vmem:[%s1 + $0xb0] sm:$0xf]
        %v280 = vld [vmem:[%s1 + $0xb4] sm:$0xf]
        %v281 = vld [vmem:[%s1 + $0xb8] sm:$0xf]
        %v282 = vld [vmem:[%s1 + $0xbc] sm:$0xf]
        %v283 = vld [vmem:[%s1 + $0xc0] sm:$0xf]
        %v284 = vld [vmem:[%s1 + $0xc4] sm:$0xf]
        %v285 = vld [vmem:[%s1 + $0xc8] sm:$0xf]
        %v286 = vld [vmem:[%s1 + $0xcc] sm:$0xf]
        %v287 = vld [vmem:[%s1 + $0xd0] sm:$0xf]
        %v288 = vld [vmem:[%s1 + $0xd4] sm:$0xf]
        %v289 = vld [vmem:[%s1 + $0xd8] sm:$0xf]
        %v290 = vld [vmem:[%s1 + $0xdc] sm:$0xf]
        %v291 = vld [vmem:[%s1 + $0xe0] sm:$0xf]
        %v292 = vld [vmem:[%s1 + $0xe4] sm:$0xf]
        %v293 = vld [vmem:[%s1 + $0xe8] sm:$0xf]
        %v294 = vld [vmem:[%s1 + $0xec] sm:$0xf]
        %v295 = vld [vmem:[%s1 + $0xf0] sm:$0xf]
        %v296 = vld [vmem:[%s1 + $0xf4] sm:$0xf]
        %v297 = vld [vmem:[%s1 + $0xf8] sm:$0xf]
        %v298 = vld [vmem:[%s1 + $0xfc] sm:$0xf]
        %v299 = vld [vmem:[%s3] sm:$0x1]
        %v300 = vlaneseq
        %v301 = vshrl.u32 %v300, 7
        %v302 = vsub.s32 0, %v301
        %v303 = vrot.slane %v299, %v302
        %v336 = vunpack.c.l.b16 %v203
        %v337 = vunpack.c.h.b16 %v203
        %v338 = vunpack.c.l.b16 %v204
        %v339 = vunpack.c.h.b16 %v204
        %v340 = vunpack.c.l.b16 %v205
        %v341 = vunpack.c.h.b16 %v205
        %v342 = vunpack.c.l.b16 %v206
        %v343 = vunpack.c.h.b16 %v206
        %v344 = vunpack.c.l.b16 %v207
        %v345 = vunpack.c.h.b16 %v207
        %v346 = vunpack.c.l.b16 %v208
        %v347 = vunpack.c.h.b16 %v208
        %v348 = vunpack.c.l.b16 %v209
        %v349 = vunpack.c.h.b16 %v209
        %v350 = vunpack.c.l.b16 %v210
        %v351 = vunpack.c.h.b16 %v210
        %v352 = vunpack.c.l.b16 %v211
        %v353 = vunpack.c.h.b16 %v211
        %v354 = vunpack.c.l.b16 %v212
        %v355 = vunpack.c.h.b16 %v212
        %v356 = vunpack.c.l.b16 %v213
        %v357 = vunpack.c.h.b16 %v213
        %v358 = vunpack.c.l.b16 %v214
        %v359 = vunpack.c.h.b16 %v214
        %v360 = vunpack.c.l.b16 %v215
        %v361 = vunpack.c.h.b16 %v215
        %v362 = vunpack.c.l.b16 %v216
        %v363 = vunpack.c.h.b16 %v216
        %v364 = vunpack.c.l.b16 %v217
        %v365 = vunpack.c.h.b16 %v217
        %v366 = vunpack.c.l.b16 %v218
        %v367 = vunpack.c.h.b16 %v218
        %v368 = vunpack.c.l.b16 %v219
        %v369 = vunpack.c.h.b16 %v219
        %v370 = vunpack.c.l.b16 %v220
        %v371 = vunpack.c.h.b16 %v220
        %v372 = vunpack.c.l.b16 %v221
        %v373 = vunpack.c.h.b16 %v221
        %v374 = vunpack.c.l.b16 %v222
        %v375 = vunpack.c.h.b16 %v222
        %v376 = vunpack.c.l.b16 %v223
        %v377 = vunpack.c.h.b16 %v223
        %v378 = vunpack.c.l.b16 %v224
        %v379 = vunpack.c.h.b16 %v224
        %v380 = vunpack.c.l.b16 %v225
        %v381 = vunpack.c.h.b16 %v225
        %v382 = vunpack.c.l.b16 %v226
        %v383 = vunpack.c.h.b16 %v226
        %v384 = vunpack.c.l.b16 %v227
        %v385 = vunpack.c.h.b16 %v227
        %v386 = vunpack.c.l.b16 %v228
        %v387 = vunpack.c.h.b16 %v228
        %v388 = vunpack.c.l.b16 %v229
        %v389 = vunpack.c.h.b16 %v229
        %v390 = vunpack.c.l.b16 %v230
        %v391 = vunpack.c.h.b16 %v230
        %v392 = vunpack.c.l.b16 %v231
        %v393 = vunpack.c.h.b16 %v231
        %v394 = vunpack.c.l.b16 %v232
        %v395 = vunpack.c.h.b16 %v232
        %v396 = vunpack.c.l.b16 %v233
        %v397 = vunpack.c.h.b16 %v233
        %v398 = vunpack.c.l.b16 %v234
        %v399 = vunpack.c.h.b16 %v234
        %v400 = vpack.c.b16 %v340, %v336
        %v401 = vpack.c.b16 %v341, %v337
        %v402 = vpack.c.b16 %v342, %v338
        %v403 = vpack.c.b16 %v343, %v339
        %v404 = vpack.c.b16 %v348, %v344
        %v405 = vpack.c.b16 %v349, %v345
        %v406 = vpack.c.b16 %v350, %v346
        %v407 = vpack.c.b16 %v351, %v347
        %v408 = vpack.c.b16 %v356, %v352
        %v409 = vpack.c.b16 %v357, %v353
        %v410 = vpack.c.b16 %v358, %v354
        %v411 = vpack.c.b16 %v359, %v355
        %v412 = vpack.c.b16 %v364, %v360
        %v413 = vpack.c.b16 %v365, %v361
        %v414 = vpack.c.b16 %v366, %v362
        %v415 = vpack.c.b16 %v367, %v363
        %v416 = vpack.c.b16 %v372, %v368
        %v417 = vpack.c.b16 %v373, %v369
        %v418 = vpack.c.b16 %v374, %v370
        %v419 = vpack.c.b16 %v375, %v371
        %v420 = vpack.c.b16 %v380, %v376
        %v421 = vpack.c.b16 %v381, %v377
        %v422 = vpack.c.b16 %v382, %v378
        %v423 = vpack.c.b16 %v383, %v379
        %v424 = vpack.c.b16 %v388, %v384
        %v425 = vpack.c.b16 %v389, %v385
        %v426 = vpack.c.b16 %v390, %v386
        %v427 = vpack.c.b16 %v391, %v387
        %v428 = vpack.c.b16 %v396, %v392
        %v429 = vpack.c.b16 %v397, %v393
        %v430 = vpack.c.b16 %v398, %v394
        %v431 = vpack.c.b16 %v399, %v395
        %v528 = vunpack.c.l.b16 %v235
        %v529 = vunpack.c.l.b16 %v236
        %v530 = vunpack.c.l.b16 %v237
        %v531 = vunpack.c.l.b16 %v238
        %v532 = vunpack.c.l.b16 %v239
        %v533 = vunpack.c.l.b16 %v240
        %v534 = vunpack.c.l.b16 %v241
        %v535 = vunpack.c.l.b16 %v242
        %v536 = vunpack.c.l.b16 %v243
        %v537 = vunpack.c.l.b16 %v244
        %v538 = vunpack.c.l.b16 %v245
        %v539 = vunpack.c.l.b16 %v246
        %v540 = vunpack.c.l.b16 %v247
        %v541 = vunpack.c.l.b16 %v248
        %v542 = vunpack.c.l.b16 %v249
        %v543 = vunpack.c.l.b16 %v250
        %v544 = vunpack.c.l.b16 %v251
        %v545 = vunpack.c.l.b16 %v252
        %v546 = vunpack.c.l.b16 %v253
        %v547 = vunpack.c.l.b16 %v254
        %v548 = vunpack.c.l.b16 %v255
        %v549 = vunpack.c.l.b16 %v256
        %v550 = vunpack.c.l.b16 %v257
        %v551 = vunpack.c.l.b16 %v258
        %v552 = vunpack.c.l.b16 %v259
        %v553 = vunpack.c.l.b16 %v260
        %v554 = vunpack.c.l.b16 %v261
        %v555 = vunpack.c.l.b16 %v262
        %v556 = vunpack.c.l.b16 %v263
        %v557 = vunpack.c.l.b16 %v264
        %v558 = vunpack.c.l.b16 %v265
        %v559 = vunpack.c.l.b16 %v266
        %v560 = vunpack.c.l.b16 %v267
        %v561 = vunpack.c.l.b16 %v268
        %v562 = vunpack.c.l.b16 %v269
        %v563 = vunpack.c.l.b16 %v270
        %v564 = vunpack.c.l.b16 %v271
        %v565 = vunpack.c.l.b16 %v272
        %v566 = vunpack.c.l.b16 %v273
        %v567 = vunpack.c.l.b16 %v274
        %v568 = vunpack.c.l.b16 %v275
        %v569 = vunpack.c.l.b16 %v276
        %v570 = vunpack.c.l.b16 %v277
        %v571 = vunpack.c.l.b16 %v278
        %v572 = vunpack.c.l.b16 %v279
        %v573 = vunpack.c.l.b16 %v280
        %v574 = vunpack.c.l.b16 %v281
        %v575 = vunpack.c.l.b16 %v282
        %v576 = vunpack.c.l.b16 %v283
        %v577 = vunpack.c.l.b16 %v284
        %v578 = vunpack.c.l.b16 %v285
        %v579 = vunpack.c.l.b16 %v286
        %v580 = vunpack.c.l.b16 %v287
        %v581 = vunpack.c.l.b16 %v288
        %v582 = vunpack.c.l.b16 %v289
        %v583 = vunpack.c.l.b16 %v290
        %v584 = vunpack.c.l.b16 %v291
        %v585 = vunpack.c.l.b16 %v292
        %v586 = vunpack.c.l.b16 %v293
        %v587 = vunpack.c.l.b16 %v294
        %v588 = vunpack.c.l.b16 %v295
        %v589 = vunpack.c.l.b16 %v296
        %v590 = vunpack.c.l.b16 %v297
        %v591 = vunpack.c.l.b16 %v298
        %v592 = vpack.c.b16 %v529, %v528
        %v593 = vpack.c.b16 %v531, %v530
        %v594 = vpack.c.b16 %v533, %v532
        %v595 = vpack.c.b16 %v535, %v534
        %v596 = vpack.c.b16 %v537, %v536
        %v597 = vpack.c.b16 %v539, %v538
        %v598 = vpack.c.b16 %v541, %v540
        %v599 = vpack.c.b16 %v543, %v542
        %v600 = vpack.c.b16 %v545, %v544
        %v601 = vpack.c.b16 %v547, %v546
        %v602 = vpack.c.b16 %v549, %v548
        %v603 = vpack.c.b16 %v551, %v550
        %v604 = vpack.c.b16 %v553, %v552
        %v605 = vpack.c.b16 %v555, %v554
        %v606 = vpack.c.b16 %v557, %v556
        %v607 = vpack.c.b16 %v559, %v558
        %v608 = vpack.c.b16 %v561, %v560
        %v609 = vpack.c.b16 %v563, %v562
        %v610 = vpack.c.b16 %v565, %v564
        %v611 = vpack.c.b16 %v567, %v566
        %v612 = vpack.c.b16 %v569, %v568
        %v613 = vpack.c.b16 %v571, %v570
        %v614 = vpack.c.b16 %v573, %v572
        %v615 = vpack.c.b16 %v575, %v574
        %v616 = vpack.c.b16 %v577, %v576
        %v617 = vpack.c.b16 %v579, %v578
        %v618 = vpack.c.b16 %v581, %v580
        %v619 = vpack.c.b16 %v583, %v582
        %v620 = vpack.c.b16 %v585, %v584
        %v621 = vpack.c.b16 %v587, %v586
        %v622 = vpack.c.b16 %v589, %v588
        %v623 = vpack.c.b16 %v591, %v590
        %656 = vmatprep.subr.bf16.mxu0 0
        %657 = vmatpush1.bf16.msra.mxu0 %v599
        %658 = vmatprep.subr.bf16.mxu0 0
        %659 = vmatpush1.bf16.msra.mxu0 %v598
        %660 = vmatprep.subr.bf16.mxu0 0
        %661 = vmatpush1.bf16.msra.mxu0 %v597
        %662 = vmatprep.subr.bf16.mxu0 0
        %663 = vmatpush1.bf16.msra.mxu0 %v596
        %664 = vmatprep.subr.bf16.mxu0 0
        %665 = vmatpush1.bf16.msra.mxu0 %v595
        %666 = vmatprep.subr.bf16.mxu0 0
        %667 = vmatpush1.bf16.msra.mxu0 %v594
        %668 = vmatprep.subr.bf16.mxu0 0
        %669 = vmatpush1.bf16.msra.mxu0 %v593
        %670 = vmatprep.subr.bf16.mxu0 0
        %671 = vmatpush1.bf16.msra.mxu0 %v592
        %672 = vmatprep.subr.bf16.mxu0 0
        %673 = vmatpush2.bf16.msra.mxu0 %v607
        %674 = vmatprep.subr.bf16.mxu0 0
        %675 = vmatpush2.bf16.msra.mxu0 %v606
        %676 = vmatprep.subr.bf16.mxu0 0
        %677 = vmatpush2.bf16.msra.mxu0 %v605
        %678 = vmatprep.subr.bf16.mxu0 0
        %679 = vmatpush2.bf16.msra.mxu0 %v604
        %680 = vmatprep.subr.bf16.mxu0 0
        %681 = vmatpush2.bf16.msra.mxu0 %v603
        %682 = vmatprep.subr.bf16.mxu0 0
        %683 = vmatpush2.bf16.msra.mxu0 %v602
        %684 = vmatprep.subr.bf16.mxu0 0
        %685 = vmatpush2.bf16.msra.mxu0 %v601
        %686 = vmatprep.subr.bf16.mxu0 0
        %687 = vmatpush2.bf16.msra.mxu0 %v600
        %688 = vmatprep.mubr.bf16.mxu0 %v401
        %689 = vmatmul.mubr.bf16.gmra.mxu0 %v400
        %v690 = vpop.f32.mrf.mxu0
        %v691 = vadd.f32 %v303, %v690
        %v692 = vpop.f32.mrf.mxu0
        %v693 = vpop.f32.mrf.mxu0
        %v694 = vadd.f32 %v303, %v693
        %v695 = vpop.f32.mrf.mxu0
        %696 = vmatprep.mubr.bf16.mxu0 %v405
        %697 = vmatmul.mubr.bf16.gmra.mxu0 %v404
        %v698 = vpop.f32.mrf.mxu0
        %v699 = vadd.f32 %v303, %v698
        %v700 = vpop.f32.mrf.mxu0
        %v701 = vpop.f32.mrf.mxu0
        %v702 = vadd.f32 %v303, %v701
        %v703 = vpop.f32.mrf.mxu0
        %704 = vmatprep.mubr.bf16.mxu0 %v409
        %705 = vmatmul.mubr.bf16.gmra.mxu0 %v408
        %v706 = vpop.f32.mrf.mxu0
        %v707 = vadd.f32 %v303, %v706
        %v708 = vpop.f32.mrf.mxu0
        %v709 = vpop.f32.mrf.mxu0
        %v710 = vadd.f32 %v303, %v709
        %v711 = vpop.f32.mrf.mxu0
        %712 = vmatprep.mubr.bf16.mxu0 %v413
        %713 = vmatmul.mubr.bf16.gmra.mxu0 %v412
        %v714 = vpop.f32.mrf.mxu0
        %v715 = vadd.f32 %v303, %v714
        %v716 = vpop.f32.mrf.mxu0
        %v717 = vpop.f32.mrf.mxu0
        %v718 = vadd.f32 %v303, %v717
        %v719 = vpop.f32.mrf.mxu0
        %720 = vmatprep.mubr.bf16.mxu0 %v417
        %721 = vmatmul.mubr.bf16.gmra.mxu0 %v416
        %v722 = vpop.f32.mrf.mxu0
        %v723 = vadd.f32 %v303, %v722
        %v724 = vpop.f32.mrf.mxu0
        %v725 = vpop.f32.mrf.mxu0
        %v726 = vadd.f32 %v303, %v725
        %v727 = vpop.f32.mrf.mxu0
        %728 = vmatprep.mubr.bf16.mxu0 %v421
        %729 = vmatmul.mubr.bf16.gmra.mxu0 %v420
        %v730 = vpop.f32.mrf.mxu0
        %v731 = vadd.f32 %v303, %v730
        %v732 = vpop.f32.mrf.mxu0
        %v733 = vpop.f32.mrf.mxu0
        %v734 = vadd.f32 %v303, %v733
        %v735 = vpop.f32.mrf.mxu0
        %736 = vmatprep.mubr.bf16.mxu0 %v425
        %737 = vmatmul.mubr.bf16.gmra.mxu0 %v424
        %v738 = vpop.f32.mrf.mxu0
        %v739 = vadd.f32 %v303, %v738
        %v740 = vpop.f32.mrf.mxu0
        %v741 = vpop.f32.mrf.mxu0
        %v742 = vadd.f32 %v303, %v741
        %v743 = vpop.f32.mrf.mxu0
        %744 = vmatprep.mubr.bf16.mxu0 %v429
        %745 = vmatmul.mubr.bf16.gmra.mxu0 %v428
        %v746 = vpop.f32.mrf.mxu0
        %v747 = vadd.f32 %v303, %v746
        %v748 = vpop.f32.mrf.mxu0
        %v749 = vpop.f32.mrf.mxu0
        %v750 = vadd.f32 %v303, %v749
        %v751 = vpop.f32.mrf.mxu0
        %752 = vdwg.mxu0
        %753 = vmatprep.subr.bf16.mxu0 0
        %754 = vmatpush1.bf16.msra.mxu0 %v615
        %755 = vmatprep.subr.bf16.mxu0 0
        %756 = vmatpush1.bf16.msra.mxu0 %v614
        %757 = vmatprep.subr.bf16.mxu0 0
        %758 = vmatpush1.bf16.msra.mxu0 %v613
        %759 = vmatprep.subr.bf16.mxu0 0
        %760 = vmatpush1.bf16.msra.mxu0 %v612
        %761 = vmatprep.subr.bf16.mxu0 0
        %762 = vmatpush1.bf16.msra.mxu0 %v611
        %763 = vmatprep.subr.bf16.mxu0 0
        %764 = vmatpush1.bf16.msra.mxu0 %v610
        %765 = vmatprep.subr.bf16.mxu0 0
        %766 = vmatpush1.bf16.msra.mxu0 %v609
        %767 = vmatprep.subr.bf16.mxu0 0
        %768 = vmatpush1.bf16.msra.mxu0 %v608
        %769 = vmatprep.subr.bf16.mxu0 0
        %770 = vmatpush2.bf16.msra.mxu0 %v623
        %771 = vmatprep.subr.bf16.mxu0 0
        %772 = vmatpush2.bf16.msra.mxu0 %v622
        %773 = vmatprep.subr.bf16.mxu0 0
        %774 = vmatpush2.bf16.msra.mxu0 %v621
        %775 = vmatprep.subr.bf16.mxu0 0
        %776 = vmatpush2.bf16.msra.mxu0 %v620
        %777 = vmatprep.subr.bf16.mxu0 0
        %778 = vmatpush2.bf16.msra.mxu0 %v619
        %779 = vmatprep.subr.bf16.mxu0 0
        %780 = vmatpush2.bf16.msra.mxu0 %v618
        %781 = vmatprep.subr.bf16.mxu0 0
        %782 = vmatpush2.bf16.msra.mxu0 %v617
        %783 = vmatprep.subr.bf16.mxu0 0
        %784 = vmatpush2.bf16.msra.mxu0 %v616
        %785 = vmatprep.mubr.bf16.mxu0 %v403
        %786 = vmatmul.mubr.bf16.gmra.mxu0 %v402
        %v787 = vpop.f32.mrf.mxu0
        %v788 = vadd.f32 %v691, %v787
        %v789 = vpop.f32.mrf.mxu0
        %v790 = vpop.f32.mrf.mxu0
        %v791 = vadd.f32 %v694, %v790
        %v792 = vpop.f32.mrf.mxu0
        %793 = vmatprep.mubr.bf16.mxu0 %v407
        %794 = vmatmul.mubr.bf16.gmra.mxu0 %v406
        %v795 = vpop.f32.mrf.mxu0
        %v796 = vadd.f32 %v699, %v795
        %v797 = vpop.f32.mrf.mxu0
        %v798 = vpop.f32.mrf.mxu0
        %v799 = vadd.f32 %v702, %v798
        %v800 = vpop.f32.mrf.mxu0
        %801 = vmatprep.mubr.bf16.mxu0 %v411
        %802 = vmatmul.mubr.bf16.gmra.mxu0 %v410
        %v803 = vpop.f32.mrf.mxu0
        %v804 = vadd.f32 %v707, %v803
        %v805 = vpop.f32.mrf.mxu0
        %v806 = vpop.f32.mrf.mxu0
        %v807 = vadd.f32 %v710, %v806
        %v808 = vpop.f32.mrf.mxu0
        %809 = vmatprep.mubr.bf16.mxu0 %v415
        %810 = vmatmul.mubr.bf16.gmra.mxu0 %v414
        %v811 = vpop.f32.mrf.mxu0
        %v812 = vadd.f32 %v715, %v811
        %v813 = vpop.f32.mrf.mxu0
        %v814 = vpop.f32.mrf.mxu0
        %v815 = vadd.f32 %v718, %v814
        %v816 = vpop.f32.mrf.mxu0
        %817 = vmatprep.mubr.bf16.mxu0 %v419
        %818 = vmatmul.mubr.bf16.gmra.mxu0 %v418
        %v819 = vpop.f32.mrf.mxu0
        %v820 = vadd.f32 %v723, %v819
        %v821 = vpop.f32.mrf.mxu0
        %v822 = vpop.f32.mrf.mxu0
        %v823 = vadd.f32 %v726, %v822
        %v824 = vpop.f32.mrf.mxu0
        %825 = vmatprep.mubr.bf16.mxu0 %v423
        %826 = vmatmul.mubr.bf16.gmra.mxu0 %v422
        %v827 = vpop.f32.mrf.mxu0
        %v828 = vadd.f32 %v731, %v827
        %v829 = vpop.f32.mrf.mxu0
        %v830 = vpop.f32.mrf.mxu0
        %v831 = vadd.f32 %v734, %v830
        %v832 = vpop.f32.mrf.mxu0
        %833 = vmatprep.mubr.bf16.mxu0 %v427
        %834 = vmatmul.mubr.bf16.gmra.mxu0 %v426
        %v835 = vpop.f32.mrf.mxu0
        %v836 = vadd.f32 %v739, %v835
        %v837 = vpop.f32.mrf.mxu0
        %v838 = vpop.f32.mrf.mxu0
        %v839 = vadd.f32 %v742, %v838
        %v840 = vpop.f32.mrf.mxu0
        %841 = vmatprep.mubr.bf16.mxu0 %v431
        %842 = vmatmul.mubr.bf16.gmra.mxu0 %v430
        %v843 = vpop.f32.mrf.mxu0
        %v844 = vadd.f32 %v747, %v843
        %v845 = vpop.f32.mrf.mxu0
        %v846 = vpop.f32.mrf.mxu0
        %v847 = vadd.f32 %v750, %v846
        %v848 = vpop.f32.mrf.mxu0
        %849 = vdwg.mxu0
        %v850 = vmax.f32 %v788, 0.0
        %v851 = vmax.f32 %v791, 0.0
        %v852 = vmax.f32 %v796, 0.0
        %v853 = vmax.f32 %v799, 0.0
        %v854 = vmax.f32 %v804, 0.0
        %v855 = vmax.f32 %v807, 0.0
        %v856 = vmax.f32 %v812, 0.0
        %v857 = vmax.f32 %v815, 0.0
        %v858 = vmax.f32 %v820, 0.0
        %v859 = vmax.f32 %v823, 0.0
        %v860 = vmax.f32 %v828, 0.0
        %v861 = vmax.f32 %v831, 0.0
        %v862 = vmax.f32 %v836, 0.0
        %v863 = vmax.f32 %v839, 0.0
        %v864 = vmax.f32 %v844, 0.0
        %v865 = vmax.f32 %v847, 0.0
        %v866 = vld [vmem:[%s2] sm:$0xf]
        %v867 = vld [vmem:[%s2 + $0x4] sm:$0xf]
        %v868 = vld [vmem:[%s2 + $0x8] sm:$0xf]
        %v869 = vld [vmem:[%s2 + $0xc] sm:$0xf]
        %v870 = vld [vmem:[%s2 + $0x10] sm:$0xf]
        %v871 = vld [vmem:[%s2 + $0x14] sm:$0xf]
        %v872 = vld [vmem:[%s2 + $0x18] sm:$0xf]
        %v873 = vld [vmem:[%s2 + $0x1c] sm:$0xf]
        %v874 = vld [vmem:[%s2 + $0x20] sm:$0xf]
        %v875 = vld [vmem:[%s2 + $0x24] sm:$0xf]
        %v876 = vld [vmem:[%s2 + $0x28] sm:$0xf]
        %v877 = vld [vmem:[%s2 + $0x2c] sm:$0xf]
        %v878 = vld [vmem:[%s2 + $0x30] sm:$0xf]
        %v879 = vld [vmem:[%s2 + $0x34] sm:$0xf]
        %v880 = vld [vmem:[%s2 + $0x38] sm:$0xf]
        %v881 = vld [vmem:[%s2 + $0x3c] sm:$0xf]
        %v882 = vpack.c.bf16 %v851, %v850
        %v883 = vpack.c.bf16 %v853, %v852
        %v884 = vpack.c.bf16 %v855, %v854
        %v885 = vpack.c.bf16 %v857, %v856
        %v886 = vpack.c.bf16 %v859, %v858
        %v887 = vpack.c.bf16 %v861, %v860
        %v888 = vpack.c.bf16 %v863, %v862
        %v889 = vpack.c.bf16 %v865, %v864
        %v890 = vld [vmem:[%s3 + $0x1] sm:$0x1]
        %v891 = vlaneseq
        %v892 = vshrl.u32 %v891, 7
        %v893 = vsub.s32 0, %v892
        %v894 = vrot.slane %v890, %v893
        %v911 = vunpack.c.l.b16 %v866
        %v912 = vunpack.c.l.b16 %v867
        %v913 = vunpack.c.l.b16 %v868
        %v914 = vunpack.c.l.b16 %v869
        %v915 = vunpack.c.l.b16 %v870
        %v916 = vunpack.c.l.b16 %v871
        %v917 = vunpack.c.l.b16 %v872
        %v918 = vunpack.c.l.b16 %v873
        %v919 = vunpack.c.l.b16 %v874
        %v920 = vunpack.c.l.b16 %v875
        %v921 = vunpack.c.l.b16 %v876
        %v922 = vunpack.c.l.b16 %v877
        %v923 = vunpack.c.l.b16 %v878
        %v924 = vunpack.c.l.b16 %v879
        %v925 = vunpack.c.l.b16 %v880
        %v926 = vunpack.c.l.b16 %v881
        %v927 = vpack.c.b16 %v912, %v911
        %v928 = vpack.c.b16 %v914, %v913
        %v929 = vpack.c.b16 %v916, %v915
        %v930 = vpack.c.b16 %v918, %v917
        %v931 = vpack.c.b16 %v920, %v919
        %v932 = vpack.c.b16 %v922, %v921
        %v933 = vpack.c.b16 %v924, %v923
        %v934 = vpack.c.b16 %v926, %v925
        %943 = vmatprep.subr.bf16.mxu0 0
        %944 = vmatpush1.bf16.msra.mxu0 %v934
        %945 = vmatprep.subr.bf16.mxu0 0
        %946 = vmatpush1.bf16.msra.mxu0 %v933
        %947 = vmatprep.subr.bf16.mxu0 0
        %948 = vmatpush1.bf16.msra.mxu0 %v932
        %949 = vmatprep.subr.bf16.mxu0 0
        %950 = vmatpush1.bf16.msra.mxu0 %v931
        %951 = vmatprep.subr.bf16.mxu0 0
        %952 = vmatpush1.bf16.msra.mxu0 %v930
        %953 = vmatprep.subr.bf16.mxu0 0
        %954 = vmatpush1.bf16.msra.mxu0 %v929
        %955 = vmatprep.subr.bf16.mxu0 0
        %956 = vmatpush1.bf16.msra.mxu0 %v928
        %957 = vmatprep.subr.bf16.mxu0 0
        %958 = vmatpush1.bf16.msra.mxu0 %v927
        %959 = vmatprep.subr.bf16.mxu0 0
        %960 = vmatpush2.bf16.msra.mxu0 0
        %961 = vmatprep.subr.bf16.mxu0 0
        %962 = vmatpush2.bf16.msra.mxu0 0
        %963 = vmatprep.subr.bf16.mxu0 0
        %964 = vmatpush2.bf16.msra.mxu0 0
        %965 = vmatprep.subr.bf16.mxu0 0
        %966 = vmatpush2.bf16.msra.mxu0 0
        %967 = vmatprep.subr.bf16.mxu0 0
        %968 = vmatpush2.bf16.msra.mxu0 0
        %969 = vmatprep.subr.bf16.mxu0 0
        %970 = vmatpush2.bf16.msra.mxu0 0
        %971 = vmatprep.subr.bf16.mxu0 0
        %972 = vmatpush2.bf16.msra.mxu0 0
        %973 = vmatprep.subr.bf16.mxu0 0
        %974 = vmatpush2.bf16.msra.mxu0 0
        %975 = vmatprep.mubr.bf16.mxu0 0
        %976 = vmatmul.mubr.bf16.gmra.mxu0 %v882
        %v977 = vpop.f32.mrf.mxu0
        %v978 = vadd.f32 %v894, %v977
        %v979 = vpop.f32.mrf.mxu0
        %v980 = vpop.f32.mrf.mxu0
        %v981 = vadd.f32 %v894, %v980
        %v982 = vpop.f32.mrf.mxu0
        %983 = vmatprep.mubr.bf16.mxu0 0
        %984 = vmatmul.mubr.bf16.gmra.mxu0 %v883
        %v985 = vpop.f32.mrf.mxu0
        %v986 = vadd.f32 %v894, %v985
        %v987 = vpop.f32.mrf.mxu0
        %v988 = vpop.f32.mrf.mxu0
        %v989 = vadd.f32 %v894, %v988
        %v990 = vpop.f32.mrf.mxu0
        %991 = vmatprep.mubr.bf16.mxu0 0
        %992 = vmatmul.mubr.bf16.gmra.mxu0 %v884
        %v993 = vpop.f32.mrf.mxu0
        %v994 = vadd.f32 %v894, %v993
        %v995 = vpop.f32.mrf.mxu0
        %v996 = vpop.f32.mrf.mxu0
        %v997 = vadd.f32 %v894, %v996
        %v998 = vpop.f32.mrf.mxu0
        %999 = vmatprep.mubr.bf16.mxu0 0
        %1000 = vmatmul.mubr.bf16.gmra.mxu0 %v885
        %v1001 = vpop.f32.mrf.mxu0
        %v1002 = vadd.f32 %v894, %v1001
        %v1003 = vpop.f32.mrf.mxu0
        %v1004 = vpop.f32.mrf.mxu0
        %v1005 = vadd.f32 %v894, %v1004
        %v1006 = vpop.f32.mrf.mxu0
        %1007 = vmatprep.mubr.bf16.mxu0 0
        %1008 = vmatmul.mubr.bf16.gmra.mxu0 %v886
        %v1009 = vpop.f32.mrf.mxu0
        %v1010 = vadd.f32 %v894, %v1009
        %v1011 = vpop.f32.mrf.mxu0
        %v1012 = vpop.f32.mrf.mxu0
        %v1013 = vadd.f32 %v894, %v1012
        %v1014 = vpop.f32.mrf.mxu0
        %1015 = vmatprep.mubr.bf16.mxu0 0
        %1016 = vmatmul.mubr.bf16.gmra.mxu0 %v887
        %v1017 = vpop.f32.mrf.mxu0
        %v1018 = vadd.f32 %v894, %v1017
        %v1019 = vpop.f32.mrf.mxu0
        %v1020 = vpop.f32.mrf.mxu0
        %v1021 = vadd.f32 %v894, %v1020
        %v1022 = vpop.f32.mrf.mxu0
        %1023 = vmatprep.mubr.bf16.mxu0 0
        %1024 = vmatmul.mubr.bf16.gmra.mxu0 %v888
        %v1025 = vpop.f32.mrf.mxu0
        %v1026 = vadd.f32 %v894, %v1025
        %v1027 = vpop.f32.mrf.mxu0
        %v1028 = vpop.f32.mrf.mxu0
        %v1029 = vadd.f32 %v894, %v1028
        %v1030 = vpop.f32.mrf.mxu0
        %1031 = vmatprep.mubr.bf16.mxu0 0
        %1032 = vmatmul.mubr.bf16.gmra.mxu0 %v889
        %v1033 = vpop.f32.mrf.mxu0
        %v1034 = vadd.f32 %v894, %v1033
        %v1035 = vpop.f32.mrf.mxu0
        %v1036 = vpop.f32.mrf.mxu0
        %v1037 = vadd.f32 %v894, %v1036
        %v1038 = vpop.f32.mrf.mxu0
        %1039 = vdwg.mxu0
        %v1040 = vmax.f32 %v978, 0.0
        %v1041 = vmax.f32 %v981, 0.0
        %v1042 = vmax.f32 %v986, 0.0
        %v1043 = vmax.f32 %v989, 0.0
        %v1044 = vmax.f32 %v994, 0.0
        %v1045 = vmax.f32 %v997, 0.0
        %v1046 = vmax.f32 %v1002, 0.0
        %v1047 = vmax.f32 %v1005, 0.0
        %v1048 = vmax.f32 %v1010, 0.0
        %v1049 = vmax.f32 %v1013, 0.0
        %v1050 = vmax.f32 %v1018, 0.0
        %v1051 = vmax.f32 %v1021, 0.0
        %v1052 = vmax.f32 %v1026, 0.0
        %v1053 = vmax.f32 %v1029, 0.0
        %v1054 = vmax.f32 %v1034, 0.0
        %v1055 = vmax.f32 %v1037, 0.0
        %s1056 = scalar_lea.vmem %s2, 64
        %v1057 = vld [vmem:[%s1056] sm:$0xf]
        %v1058 = vld [vmem:[%s1056 + $0x4] sm:$0xf]
        %v1059 = vld [vmem:[%s1056 + $0x8] sm:$0xf]
        %v1060 = vld [vmem:[%s1056 + $0xc] sm:$0xf]
        %v1061 = vld [vmem:[%s1056 + $0x10] sm:$0xf]
        %v1062 = vld [vmem:[%s1056 + $0x14] sm:$0xf]
        %v1063 = vld [vmem:[%s1056 + $0x18] sm:$0xf]
        %v1064 = vld [vmem:[%s1056 + $0x1c] sm:$0xf]
        %v1065 = vld [vmem:[%s1056 + $0x20] sm:$0xf]
        %v1066 = vld [vmem:[%s1056 + $0x24] sm:$0xf]
        %v1067 = vld [vmem:[%s1056 + $0x28] sm:$0xf]
        %v1068 = vld [vmem:[%s1056 + $0x2c] sm:$0xf]
        %v1069 = vld [vmem:[%s1056 + $0x30] sm:$0xf]
        %v1070 = vld [vmem:[%s1056 + $0x34] sm:$0xf]
        %v1071 = vld [vmem:[%s1056 + $0x38] sm:$0xf]
        %v1072 = vld [vmem:[%s1056 + $0x3c] sm:$0xf]
        %v1073 = vpack.c.bf16 %v1041, %v1040
        %v1074 = vpack.c.bf16 %v1043, %v1042
        %v1075 = vpack.c.bf16 %v1045, %v1044
        %v1076 = vpack.c.bf16 %v1047, %v1046
        %v1077 = vpack.c.bf16 %v1049, %v1048
        %v1078 = vpack.c.bf16 %v1051, %v1050
        %v1079 = vpack.c.bf16 %v1053, %v1052
        %v1080 = vpack.c.bf16 %v1055, %v1054
        %v1081 = vld [vmem:[%s3 + $0x2] sm:$0x1]
        %v1082 = vlaneseq
        %v1083 = vshrl.u32 %v1082, 7
        %v1084 = vsub.s32 0, %v1083
        %v1085 = vrot.slane %v1081, %v1084
        %v1102 = vunpack.c.l.b16 %v1057
        %v1103 = vunpack.c.l.b16 %v1058
        %v1104 = vunpack.c.l.b16 %v1059
        %v1105 = vunpack.c.l.b16 %v1060
        %v1106 = vunpack.c.l.b16 %v1061
        %v1107 = vunpack.c.l.b16 %v1062
        %v1108 = vunpack.c.l.b16 %v1063
        %v1109 = vunpack.c.l.b16 %v1064
        %v1110 = vunpack.c.l.b16 %v1065
        %v1111 = vunpack.c.l.b16 %v1066
        %v1112 = vunpack.c.l.b16 %v1067
        %v1113 = vunpack.c.l.b16 %v1068
        %v1114 = vunpack.c.l.b16 %v1069
        %v1115 = vunpack.c.l.b16 %v1070
        %v1116 = vunpack.c.l.b16 %v1071
        %v1117 = vunpack.c.l.b16 %v1072
        %v1118 = vpack.c.b16 %v1103, %v1102
        %v1119 = vpack.c.b16 %v1105, %v1104
        %v1120 = vpack.c.b16 %v1107, %v1106
        %v1121 = vpack.c.b16 %v1109, %v1108
        %v1122 = vpack.c.b16 %v1111, %v1110
        %v1123 = vpack.c.b16 %v1113, %v1112
        %v1124 = vpack.c.b16 %v1115, %v1114
        %v1125 = vpack.c.b16 %v1117, %v1116
        %1134 = vmatprep.subr.bf16.mxu0 0
        %1135 = vmatpush1.bf16.msra.mxu0 %v1125
        %1136 = vmatprep.subr.bf16.mxu0 0
        %1137 = vmatpush1.bf16.msra.mxu0 %v1124
        %1138 = vmatprep.subr.bf16.mxu0 0
        %1139 = vmatpush1.bf16.msra.mxu0 %v1123
        %1140 = vmatprep.subr.bf16.mxu0 0
        %1141 = vmatpush1.bf16.msra.mxu0 %v1122
        %1142 = vmatprep.subr.bf16.mxu0 0
        %1143 = vmatpush1.bf16.msra.mxu0 %v1121
        %1144 = vmatprep.subr.bf16.mxu0 0
        %1145 = vmatpush1.bf16.msra.mxu0 %v1120
        %1146 = vmatprep.subr.bf16.mxu0 0
        %1147 = vmatpush1.bf16.msra.mxu0 %v1119
        %1148 = vmatprep.subr.bf16.mxu0 0
        %1149 = vmatpush1.bf16.msra.mxu0 %v1118
        %1150 = vmatprep.subr.bf16.mxu0 0
        %1151 = vmatpush2.bf16.msra.mxu0 0
        %1152 = vmatprep.subr.bf16.mxu0 0
        %1153 = vmatpush2.bf16.msra.mxu0 0
        %1154 = vmatprep.subr.bf16.mxu0 0
        %1155 = vmatpush2.bf16.msra.mxu0 0
        %1156 = vmatprep.subr.bf16.mxu0 0
        %1157 = vmatpush2.bf16.msra.mxu0 0
        %1158 = vmatprep.subr.bf16.mxu0 0
        %1159 = vmatpush2.bf16.msra.mxu0 0
        %1160 = vmatprep.subr.bf16.mxu0 0
        %1161 = vmatpush2.bf16.msra.mxu0 0
        %1162 = vmatprep.subr.bf16.mxu0 0
        %1163 = vmatpush2.bf16.msra.mxu0 0
        %1164 = vmatprep.subr.bf16.mxu0 0
        %1165 = vmatpush2.bf16.msra.mxu0 0
        %1166 = vmatprep.mubr.bf16.mxu0 0
        %1167 = vmatmul.mubr.bf16.gmra.mxu0 %v1073
        %v1168 = vpop.f32.mrf.mxu0
        %v1169 = vadd.f32 %v1085, %v1168
        %v1170 = vpop.f32.mrf.mxu0
        %v1171 = vpop.f32.mrf.mxu0
        %v1172 = vadd.f32 %v1085, %v1171
        %v1173 = vpop.f32.mrf.mxu0
        %1174 = vmatprep.mubr.bf16.mxu0 0
        %1175 = vmatmul.mubr.bf16.gmra.mxu0 %v1074
        %v1176 = vpop.f32.mrf.mxu0
        %v1177 = vadd.f32 %v1085, %v1176
        %v1178 = vpop.f32.mrf.mxu0
        %v1179 = vpop.f32.mrf.mxu0
        %v1180 = vadd.f32 %v1085, %v1179
        %v1181 = vpop.f32.mrf.mxu0
        %1182 = vmatprep.mubr.bf16.mxu0 0
        %1183 = vmatmul.mubr.bf16.gmra.mxu0 %v1075
        %v1184 = vpop.f32.mrf.mxu0
        %v1185 = vadd.f32 %v1085, %v1184
        %v1186 = vpop.f32.mrf.mxu0
        %v1187 = vpop.f32.mrf.mxu0
        %v1188 = vadd.f32 %v1085, %v1187
        %v1189 = vpop.f32.mrf.mxu0
        %1190 = vmatprep.mubr.bf16.mxu0 0
        %1191 = vmatmul.mubr.bf16.gmra.mxu0 %v1076
        %v1192 = vpop.f32.mrf.mxu0
        %v1193 = vadd.f32 %v1085, %v1192
        %v1194 = vpop.f32.mrf.mxu0
        %v1195 = vpop.f32.mrf.mxu0
        %v1196 = vadd.f32 %v1085, %v1195
        %v1197 = vpop.f32.mrf.mxu0
        %1198 = vmatprep.mubr.bf16.mxu0 0
        %1199 = vmatmul.mubr.bf16.gmra.mxu0 %v1077
        %v1200 = vpop.f32.mrf.mxu0
        %v1201 = vadd.f32 %v1085, %v1200
        %v1202 = vpop.f32.mrf.mxu0
        %v1203 = vpop.f32.mrf.mxu0
        %v1204 = vadd.f32 %v1085, %v1203
        %v1205 = vpop.f32.mrf.mxu0
        %1206 = vmatprep.mubr.bf16.mxu0 0
        %1207 = vmatmul.mubr.bf16.gmra.mxu0 %v1078
        %v1208 = vpop.f32.mrf.mxu0
        %v1209 = vadd.f32 %v1085, %v1208
        %v1210 = vpop.f32.mrf.mxu0
        %v1211 = vpop.f32.mrf.mxu0
        %v1212 = vadd.f32 %v1085, %v1211
        %v1213 = vpop.f32.mrf.mxu0
        %1214 = vmatprep.mubr.bf16.mxu0 0
        %1215 = vmatmul.mubr.bf16.gmra.mxu0 %v1079
        %v1216 = vpop.f32.mrf.mxu0
        %v1217 = vadd.f32 %v1085, %v1216
        %v1218 = vpop.f32.mrf.mxu0
        %v1219 = vpop.f32.mrf.mxu0
        %v1220 = vadd.f32 %v1085, %v1219
        %v1221 = vpop.f32.mrf.mxu0
        %1222 = vmatprep.mubr.bf16.mxu0 0
        %1223 = vmatmul.mubr.bf16.gmra.mxu0 %v1080
        %v1224 = vpop.f32.mrf.mxu0
        %v1225 = vadd.f32 %v1085, %v1224
        %v1226 = vpop.f32.mrf.mxu0
        %v1227 = vpop.f32.mrf.mxu0
        %v1228 = vadd.f32 %v1085, %v1227
        %v1229 = vpop.f32.mrf.mxu0
        %1230 = vdwg.mxu0
        %v1231 = vmax.f32 %v1169, 0.0
        %v1232 = vmax.f32 %v1172, 0.0
        %v1233 = vmax.f32 %v1177, 0.0
        %v1234 = vmax.f32 %v1180, 0.0
        %v1235 = vmax.f32 %v1185, 0.0
        %v1236 = vmax.f32 %v1188, 0.0
        %v1237 = vmax.f32 %v1193, 0.0
        %v1238 = vmax.f32 %v1196, 0.0
        %v1239 = vmax.f32 %v1201, 0.0
        %v1240 = vmax.f32 %v1204, 0.0
        %v1241 = vmax.f32 %v1209, 0.0
        %v1242 = vmax.f32 %v1212, 0.0
        %v1243 = vmax.f32 %v1217, 0.0
        %v1244 = vmax.f32 %v1220, 0.0
        %v1245 = vmax.f32 %v1225, 0.0
        %v1246 = vmax.f32 %v1228, 0.0
        %1247 = vst [vmem:[%s193] sm:$0xff] %v1231
        %1248 = vst [vmem:[%s193 + $0x8] sm:$0xff] %v1232
        %1249 = vst [vmem:[%s193 + $0x10] sm:$0xff] %v1233
        %1250 = vst [vmem:[%s193 + $0x18] sm:$0xff] %v1234
        %1251 = vst [vmem:[%s193 + $0x20] sm:$0xff] %v1235
        %1252 = vst [vmem:[%s193 + $0x28] sm:$0xff] %v1236
        %1253 = vst [vmem:[%s193 + $0x30] sm:$0xff] %v1237
        %1254 = vst [vmem:[%s193 + $0x38] sm:$0xff] %v1238
        %1255 = vst [vmem:[%s193 + $0x40] sm:$0xff] %v1239
        %1256 = vst [vmem:[%s193 + $0x48] sm:$0xff] %v1240
        %1257 = vst [vmem:[%s193 + $0x50] sm:$0xff] %v1241
        %1258 = vst [vmem:[%s193 + $0x58] sm:$0xff] %v1242
        %1259 = vst [vmem:[%s193 + $0x60] sm:$0xff] %v1243
        %1260 = vst [vmem:[%s193 + $0x68] sm:$0xff] %v1244
        %1261 = vst [vmem:[%s193 + $0x70] sm:$0xff] %v1245
        %1262 = vst [vmem:[%s193 + $0x78] sm:$0xff] %v1246
        %s1263 = sand.u32 %s115, 1
        %s1264 = scalar_lea.sflag [#allocation3], %s1263
        %s1265 = sand.u32 %s115, 1
        %s1266 = smul.addr %s1265, 128
        %s1267 = scalar_lea.vmem [#allocation2], %s1266
        // Predicated region
        $region37: #{forward_fused.1} parent=35 // pred_check
          %p1268 = pneg %p125
        $region38: #{forward_fused.1} parent=35 // pred_check_branch
          %1270 = sbr.rel (%p1268) target = $region40
        $region39: #{forward_fused.1} parent=35 // pred_region
          %s1271 = smul.u32 16, %s18
          %s1273 = ssub.s32 2048, 2048
          %1274 = vsyncadd %s1264, %s1273
          %s1275 = smul.addr %s1271, 128
          %s1276 = scalar_lea.hbm %s4, %s1275
          %s1277 = sshll.u32 %s1267, 4
          %s1278 = int_to_ptr.vmem [resolvable:$true] %s1277
          %1283 = dma.vmem_to_hbm [thread:$0]  %s1278, 2048, %s1276, %s1264, 128, 128, 8
        $region40: #{forward_fused.1} parent=35 // pred_fallthru
          _
      $region36: #{forward_fused.1} parent=5 // pred_fallthru
        _
      %p1284 = scmp.le.s32.totalorder 2, %s13
      // Predicated region
      $region41: #{forward_fused.1} parent=5 // pred_check
        %p1285 = pneg %p1284
      $region42: #{forward_fused.1} parent=5 // pred_check_branch
        %1287 = sbr.rel (%p1285) target = $region44
      $region43: #{forward_fused.1} parent=5 // pred_region
        %s1288 = ssub.s32 %s13, 2
        // Predicated region
        $region45: #{forward_fused.1} parent=43 // pred_check
          %p1289 = pneg %p131
        $region46: #{forward_fused.1} parent=43 // pred_check_branch
          %1291 = sbr.rel (%p1289) target = $region48
        $region47: #{forward_fused.1} parent=43 // pred_region
          %s1292 = sand.u32 %s116, 1
          %s1293 = scalar_lea.sflag [#allocation3], %s1292
          %s1294 = sand.u32 %s116, 1
          %s1295 = smul.addr %s1294, 128
          %s1296 = scalar_lea.vmem [#allocation2], %s1295
          %1297 = dma.done %s1293, 2048
        $region48: #{forward_fused.1} parent=43 // pred_fallthru
          _
      $region44: #{forward_fused.1} parent=5 // pred_fallthru
        _
    $region6: #{forward_fused.1} parent=1 // loop_footer
      %s17 = sadd.s32 1, %s13
    $region7: #{forward_fused.1} parent=1 // loop_footer_branch
      %12 = sbr.rel target = $region3
    $region8: #{forward_fused.1} parent=1 // loop_exit
      _
    %1298 = vsyncpa [#allocation3], 1
    %s1299 = scalar_lea.sflag [#allocation3], 1
    %1300 = vsyncpa %s1299, 1

</llo_original>
